<compile_context>
chip_gen: v7x
topology: tpu7x:2x2x1
jax: 0.10.0
libtpu: 0.0.40
codegen_flags: <defaults>
</compile_context>

<pallas_src>
import jax
import jax.numpy as jnp
from jax.experimental import pallas as pl
from jax.experimental.pallas import tpu as pltpu


def _residual_1x1_kernel(x_ref, wc_ref, wp_ref, b_ref, o_ref, carry_ref):
    # x_ref    : (BN, Cin, TL)   batch-row block, one time tile     (streamed)
    # wc_ref   : (Cout, Cin)     weight for x[t]                    (resident)
    # wp_ref   : (Cout, Cin)     weight for x[t-1]                  (resident)
    # b_ref    : (Cout, 1)       folded bias (f32)                  (resident)
    # o_ref    : (BN, Cout, TL)  output tile
    # carry_ref: (BN, Cin, 1)    last time column of previous tile  (VMEM scratch)
    j = pl.program_id(1)

    @pl.when(j == 0)
    def _():
        # Start of a batch-row block: causal zero-pad (ZeroPad2d((1, 0))).
        carry_ref[...] = jnp.zeros_like(carry_ref)

    bn, cin, tl = x_ref.shape
    lane0 = jax.lax.broadcasted_iota(jnp.int32, (cin, tl), 1) == 0  # hoisted
    wc = wc_ref[...]
    wp = wp_ref[...]
    bias = b_ref[...]

    def body(bi, carry):
        xb = x_ref[bi]                                    # (Cin, TL)
        rolled = pltpu.roll(xb, shift=1, axis=1)          # XLU lane rotate
        x_prev = jnp.where(lane0, carry_ref[bi], rolled)  # fix column 0 from carry
        carry_ref[bi] = xb[:, tl - 1:]                    # halo for next time tile
        acc = jnp.dot(wc, xb, preferred_element_type=jnp.float32)
        acc = acc + jnp.dot(wp, x_prev, preferred_element_type=jnp.float32)
        o_ref[bi] = (acc + bias).astype(o_ref.dtype)
        return carry

    if bn <= 8:
        for bi in range(bn):                              # small: static unroll
            body(bi, None)
    else:
        jax.lax.fori_loop(0, bn, body, None)              # large: rolled loop


def residual_1x1_block(x, w_temporal, b_temporal, w_res, b_res, *,
                       compute_dtype=None):
    """x: (N, Cin, L) in NCL layout (same as PyTorch Conv1d). Returns (N, Cout, L)."""
    N, Cin, L = x.shape
    Cout = w_temporal.shape[0]
    assert w_temporal.shape == (Cout, Cin, 2)
    assert w_res.shape == (Cout, Cin, 1)

    cdt = compute_dtype if compute_dtype is not None else x.dtype
    out_dtype = cdt

    # Fold the temporal conv (k=2) + 1x1 residual conv into two matrices + bias.
    w_cur = (w_temporal[:, :, 1] + w_res[:, :, 0]).astype(cdt)   # coeff of x[t]
    w_prev = w_temporal[:, :, 0].astype(cdt)                     # coeff of x[t-1]
    bias = (b_temporal + b_res).reshape(Cout, 1).astype(jnp.float32)
    x_c = x.astype(cdt)

    in_item = jnp.dtype(cdt).itemsize
    out_item = jnp.dtype(out_dtype).itemsize

    # ---- byte-driven tile selection ---------------------------------------
    try:
        vmem_cap = int(pltpu.get_tpu_info().vmem_capacity_bytes)
    except Exception:
        vmem_cap = 64 * 1024 * 1024          # conservative (v7x per-TC VMEM)
    mib = 1024 * 1024
    resident = 2 * (2 * Cout * Cin * in_item + Cout * 4)     # weights+bias (x2 safety)
    slack = 4 * mib
    # Budget for the double-buffered x + out streams.  Capped at 48 MiB so the
    # working set stays safe on v7x (64 MiB VMEM); larger caps are free on
    # v5e/v6e but unnecessary for roofline.
    stream_budget = max(min(vmem_cap // 2, 48 * mib) - resident - slack, 2 * mib)
    per_lane_row = 2 * (Cin * in_item + Cout * out_item)     # 2x = double-buffered

    def _round_up(a, m):
        return (a + m - 1) // m * m

    if per_lane_row * L <= stream_budget:
        # Whole L in one tile; block multiple batch rows per step instead.
        tl, l_pad = L, L
        bn_cap = max(stream_budget // max(per_lane_row * L, 1), 1)
    else:
        bn_cap = 1
        lanes = max((stream_budget // per_lane_row) // 128 * 128, 128)
        tl = min(lanes, _round_up(L, 128))
        if L % 128 == 0:
            # Prefer a multiple-of-128 divisor of L (no pad copy) if big enough.
            m = L // 128
            best = 0
            for d in range(1, m + 1):
                if m % d == 0 and d * 128 <= lanes:
                    best = d * 128
            if best * 2 >= tl:
                tl = best
        l_pad = _round_up(L, tl)

    # Keep the (padded) carry scratch small.
    carry_row_bytes = max(_round_up(Cin, 8), 8) * 128 * in_item
    bn_cap = min(bn_cap, max((4 * mib) // carry_row_bytes, 1))

    # BN = largest divisor of N within the byte budget.
    bn = 1
    for d in range(1, N + 1):
        if N % d == 0 and d <= bn_cap:
            bn = d

    if l_pad != L:
        # Trailing zero pad only touches sliced-off output columns.
        x_c = jnp.pad(x_c, ((0, 0), (0, 0), (0, l_pad - L)))

    n_b = N // bn
    n_l = l_pad // tl

    x_tile = bn * Cin * tl * in_item
    o_tile = bn * Cout * tl * out_item
    carry_pad = bn * carry_row_bytes
    working = 2 * (x_tile + o_tile) + resident + carry_pad
    vmem_limit = int(min(vmem_cap, max(working + slack, 16 * mib)))

    cost = pl.CostEstimate(
        flops=4 * Cin * Cout * N * L,
        transcendentals=0,
        bytes_accessed=(x_c.size * in_item + N * Cout * l_pad * out_item
                        + (w_cur.size + w_prev.size) * in_item + bias.size * 4),
    )

    out = pl.pallas_call(
        _residual_1x1_kernel,
        out_shape=jax.ShapeDtypeStruct((N, Cout, l_pad), out_dtype),
        grid=(n_b, n_l),
        in_specs=[
            pl.BlockSpec((bn, Cin, tl), lambda b, j: (b, 0, j)),     # streamed x
            pl.BlockSpec((Cout, Cin), lambda b, j: (0, 0)),          # resident
            pl.BlockSpec((Cout, Cin), lambda b, j: (0, 0)),          # resident
            pl.BlockSpec((Cout, 1), lambda b, j: (0, 0)),            # resident
        ],
        out_specs=pl.BlockSpec((bn, Cout, tl), lambda b, j: (b, 0, j)),
        scratch_shapes=[pltpu.VMEM((bn, Cin, 1), cdt)],              # time carry
        compiler_params=pltpu.CompilerParams(
            dimension_semantics=("parallel", "arbitrary"),
            vmem_limit_bytes=vmem_limit,
        ),
        cost_estimate=cost,
    )(x_c, w_cur, w_prev, bias)

    if l_pad != L:
        out = out[:, :, :L]
    return out


def _reference(x, w_temporal, b_temporal, w_res, b_res):
    """Pure-JAX reference mirroring the PyTorch forward."""
    N, Cin, L = x.shape
    # pad = nn.ZeroPad2d((1, 0)) on (N, C, L) pads the last dim on the left.
    x_pad = jnp.pad(x, ((0, 0), (0, 0), (1, 0)))                       # (N, Cin, L+1)
    t0 = jnp.einsum("ncl,oc->nol", x_pad[:, :, :L], w_temporal[:, :, 0])
    t1 = jnp.einsum("ncl,oc->nol", x_pad[:, :, 1:L + 1], w_temporal[:, :, 1])
    temporal = t0 + t1 + b_temporal[None, :, None]
    residual = jnp.einsum("ncl,oc->nol", x, w_res[:, :, 0]) + b_res[None, :, None]
    return temporal + residual


if __name__ == "__main__":
    # TODO(synk): ConvolutionalBlock / CausalConv1d are not defined in the source
    # file; ConvolutionalBlock is assumed to be a plain valid Conv1d(k=2) and the
    # unused conv_1x1_2 branch (and forward's print()s) are omitted.
    N, Cin, Cout, L, K = 2, 4, 8, 16, 2

    key = jax.random.PRNGKey(0)
    k1, k2, k3, k4, k5 = jax.random.split(key, 5)
    x = jax.random.normal(k1, (N, Cin, L), dtype=jnp.float32)
    w_temporal = jax.random.normal(k2, (Cout, Cin, K), dtype=jnp.float32) * 0.1
    b_temporal = jax.random.normal(k3, (Cout,), dtype=jnp.float32) * 0.1
    w_res = jax.random.normal(k4, (Cout, Cin, 1), dtype=jnp.float32) * 0.1
    b_res = jax.random.normal(k5, (Cout,), dtype=jnp.float32) * 0.1

    ref = _reference(x, w_temporal, b_temporal, w_res, b_res)

    # f32 path (exact parity with the PyTorch module).
    out = residual_1x1_block(x, w_temporal, b_temporal, w_res, b_res)
    out = jax.block_until_ready(out)
    assert out.shape == (N, Cout, L), out.shape
    assert jnp.allclose(out, ref, atol=1e-5, rtol=1e-5), float(
        jnp.max(jnp.abs(out - ref)))

    # bf16 data path (HBM-bound kernel -> ~2x fewer bytes); loose tolerance.
    out_bf16 = residual_1x1_block(x, w_temporal, b_temporal, w_res, b_res,
                                  compute_dtype=jnp.bfloat16)
    out_bf16 = jax.block_until_ready(out_bf16)
    assert out_bf16.shape == (N, Cout, L), out_bf16.shape
    assert jnp.allclose(out_bf16.astype(jnp.float32), ref, atol=0.1, rtol=0.1), float(
        jnp.max(jnp.abs(out_bf16.astype(jnp.float32) - ref)))

    print("KERNEL_OK")
</pallas_src>

<mosaic_0001>
module attributes {stable_mosaic.version = 11 : i64} {
  func.func @_residual_1x1_kernel(%arg0: i32, %arg1: i32, %arg2: memref<2x4x16xf32, #tpu.memory_space<vmem>>, %arg3: memref<8x4xf32, #tpu.memory_space<vmem>>, %arg4: memref<8x4xf32, #tpu.memory_space<vmem>>, %arg5: memref<8x1xf32, #tpu.memory_space<vmem>>, %arg6: memref<2x8x16xf32, #tpu.memory_space<vmem>>, %arg7: memref<2x4x1xf32, #tpu.memory_space<vmem>>) attributes {dimension_semantics = [#tpu.dimension_semantics<parallel>, #tpu.dimension_semantics<arbitrary>], iteration_bounds = array<i64: 1, 1>, scalar_prefetch = 0 : i64, scratch_operands = 1 : i64, tpu.core_type = #tpu.core_type<tc>, window_params = [{transform_indices = @transform_0, window_bounds = array<i64: 2, 4, 16>}, {pipeline_mode = #tpu.pipeline_mode<synchronous>, transform_indices = @transform_1, window_bounds = array<i64: 8, 4>}, {pipeline_mode = #tpu.pipeline_mode<synchronous>, transform_indices = @transform_2, window_bounds = array<i64: 8, 4>}, {pipeline_mode = #tpu.pipeline_mode<synchronous>, transform_indices = @transform_3, window_bounds = array<i64: 8, 1>}, {transform_indices = @transform_4, window_bounds = array<i64: 2, 8, 16>}]} {
    %c0_i32 = arith.constant 0 : i32
    %0 = arith.cmpi eq, %arg1, %c0_i32 : i32
    %1 = arith.extui %0 : i1 to i32
    %c0_i32_0 = arith.constant 0 : i32
    %2 = arith.cmpi ne, %1, %c0_i32_0 : i32
    scf.if %2 {
      %cst_34 = arith.constant 0.000000e+00 : f32
      %49 = vector.broadcast %cst_34 : f32 to vector<2x4x1xf32>
      %c0_35 = arith.constant 0 : index
      %c0_36 = arith.constant 0 : index
      %c0_37 = arith.constant 0 : index
      %50 = vector.load %arg7[%c0_35, %c0_36, %c0_37] : memref<2x4x1xf32, #tpu.memory_space<vmem>>, vector<2x4x1xf32>
      tpu.vector_store %arg7[%c0_35, %c0_36, %c0_37], %49 {strides = array<i32>} : memref<2x4x1xf32, #tpu.memory_space<vmem>>, vector<2x4x1xf32>,
    } else {
    }
    %3 = tpu.iota {dimensions = array<i32: 1>} : vector<4x16xi32>
    %c0_i32_1 = arith.constant 0 : i32
    %4 = vector.broadcast %c0_i32_1 : i32 to vector<4x16xi32>
    %5 = arith.cmpi eq, %3, %4 : vector<4x16xi32>
    %c0 = arith.constant 0 : index
    %c0_2 = arith.constant 0 : index
    %6 = vector.load %arg3[%c0, %c0_2] : memref<8x4xf32, #tpu.memory_space<vmem>>, vector<8x4xf32>
    %c0_3 = arith.constant 0 : index
    %c0_4 = arith.constant 0 : index
    %7 = vector.load %arg4[%c0_3, %c0_4] : memref<8x4xf32, #tpu.memory_space<vmem>>, vector<8x4xf32>
    %c0_5 = arith.constant 0 : index
    %c0_6 = arith.constant 0 : index
    %8 = vector.load %arg5[%c0_5, %c0_6] : memref<8x1xf32, #tpu.memory_space<vmem>>, vector<8x1xf32>
    %c0_7 = arith.constant 0 : index
    %c0_8 = arith.constant 0 : index
    %c0_9 = arith.constant 0 : index
    %9 = vector.load %arg2[%c0_7, %c0_8, %c0_9] : memref<2x4x16xf32, #tpu.memory_space<vmem>>, vector<1x4x16xf32>
    %10 = vector.shape_cast %9 : vector<1x4x16xf32> to vector<4x16xf32>
    %c1_i32 = arith.constant 1 : i32
    %11 = tpu.dynamic_rotate %10 by %c1_i32 dim 1 : vector<4x16xf32>, i32 -> vector<4x16xf32>
    %c0_10 = arith.constant 0 : index
    %c0_11 = arith.constant 0 : index
    %c0_12 = arith.constant 0 : index
    %12 = vector.load %arg7[%c0_10, %c0_11, %c0_12] : memref<2x4x1xf32, #tpu.memory_space<vmem>>, vector<1x4x1xf32>
    %13 = vector.shape_cast %12 : vector<1x4x1xf32> to vector<4x1xf32>
    %14 = vector.shape_cast %13 : vector<4x1xf32> to vector<4x1xf32>
    %15 = vector.broadcast %14 : vector<4x1xf32> to vector<4x16xf32>
    %16 = arith.select %5, %15, %11 : vector<4x16xi1>, vector<4x16xf32>
    %17 = vector.extract_strided_slice %10 {offsets = [0, 15], sizes = [4, 1], strides = [1, 1]} : vector<4x16xf32> to vector<4x1xf32>
    %c0_13 = arith.constant 0 : index
    %c0_14 = arith.constant 0 : index
    %c0_15 = arith.constant 0 : index
    %18 = vector.load %arg7[%c0_13, %c0_14, %c0_15] : memref<2x4x1xf32, #tpu.memory_space<vmem>>, vector<1x4x1xf32>
    %19 = vector.shape_cast %18 : vector<1x4x1xf32> to vector<4x1xf32>
    %20 = vector.shape_cast %17 : vector<4x1xf32> to vector<1x4x1xf32>
    tpu.vector_store %arg7[%c0_13, %c0_14, %c0_15], %20 {strides = array<i32>} : memref<2x4x1xf32, #tpu.memory_space<vmem>>, vector<1x4x1xf32>,
    %cst = arith.constant dense<0.000000e+00> : vector<8x16xf32>
    %21 = tpu.matmul %6, %10, %cst {dimension_numbers = #tpu.dot_dimension_numbers<[1], [0], [0], [1], [0, 0, 1, 1], [], []>} : vector<8x4xf32>, vector<4x16xf32>, vector<8x16xf32> -> vector<8x16xf32>
    %cst_16 = arith.constant dense<0.000000e+00> : vector<8x16xf32>
    %22 = tpu.matmul %7, %16, %cst_16 {dimension_numbers = #tpu.dot_dimension_numbers<[1], [0], [0], [1], [0, 0, 1, 1], [], []>} : vector<8x4xf32>, vector<4x16xf32>, vector<8x16xf32> -> vector<8x16xf32>
    %23 = arith.addf %21, %22 : vector<8x16xf32>
    %24 = vector.broadcast %8 : vector<8x1xf32> to vector<8x16xf32>
    %25 = arith.addf %23, %24 : vector<8x16xf32>
    %c0_17 = arith.constant 0 : index
    %c0_18 = arith.constant 0 : index
    %c0_19 = arith.constant 0 : index
    %26 = vector.load %arg6[%c0_17, %c0_18, %c0_19] : memref<2x8x16xf32, #tpu.memory_space<vmem>>, vector<1x8x16xf32>
    %27 = vector.shape_cast %26 : vector<1x8x16xf32> to vector<8x16xf32>
    %28 = vector.shape_cast %25 : vector<8x16xf32> to vector<1x8x16xf32>
    tpu.vector_store %arg6[%c0_17, %c0_18, %c0_19], %28 {strides = array<i32>} : memref<2x8x16xf32, #tpu.memory_space<vmem>>, vector<1x8x16xf32>,
    %c1 = arith.constant 1 : index
    %c0_20 = arith.constant 0 : index
    %c0_21 = arith.constant 0 : index
    %29 = vector.load %arg2[%c1, %c0_20, %c0_21] : memref<2x4x16xf32, #tpu.memory_space<vmem>>, vector<1x4x16xf32>
    %30 = vector.shape_cast %29 : vector<1x4x16xf32> to vector<4x16xf32>
    %c1_i32_22 = arith.constant 1 : i32
    %31 = tpu.dynamic_rotate %30 by %c1_i32_22 dim 1 : vector<4x16xf32>, i32 -> vector<4x16xf32>
    %c1_23 = arith.constant 1 : index
    %c0_24 = arith.constant 0 : index
    %c0_25 = arith.constant 0 : index
    %32 = vector.load %arg7[%c1_23, %c0_24, %c0_25] : memref<2x4x1xf32, #tpu.memory_space<vmem>>, vector<1x4x1xf32>
    %33 = vector.shape_cast %32 : vector<1x4x1xf32> to vector<4x1xf32>
    %34 = vector.shape_cast %33 : vector<4x1xf32> to vector<4x1xf32>
    %35 = vector.broadcast %34 : vector<4x1xf32> to vector<4x16xf32>
    %36 = arith.select %5, %35, %31 : vector<4x16xi1>, vector<4x16xf32>
    %37 = vector.extract_strided_slice %30 {offsets = [0, 15], sizes = [4, 1], strides = [1, 1]} : vector<4x16xf32> to vector<4x1xf32>
    %c1_26 = arith.constant 1 : index
    %c0_27 = arith.constant 0 : index
    %c0_28 = arith.constant 0 : index
    %38 = vector.load %arg7[%c1_26, %c0_27, %c0_28] : memref<2x4x1xf32, #tpu.memory_space<vmem>>, vector<1x4x1xf32>
    %39 = vector.shape_cast %38 : vector<1x4x1xf32> to vector<4x1xf32>
    %40 = vector.shape_cast %37 : vector<4x1xf32> to vector<1x4x1xf32>
    tpu.vector_store %arg7[%c1_26, %c0_27, %c0_28], %40 {strides = array<i32>} : memref<2x4x1xf32, #tpu.memory_space<vmem>>, vector<1x4x1xf32>,
    %cst_29 = arith.constant dense<0.000000e+00> : vector<8x16xf32>
    %41 = tpu.matmul %6, %30, %cst_29 {dimension_numbers = #tpu.dot_dimension_numbers<[1], [0], [0], [1], [0, 0, 1, 1], [], []>} : vector<8x4xf32>, vector<4x16xf32>, vector<8x16xf32> -> vector<8x16xf32>
    %cst_30 = arith.constant dense<0.000000e+00> : vector<8x16xf32>
    %42 = tpu.matmul %7, %36, %cst_30 {dimension_numbers = #tpu.dot_dimension_numbers<[1], [0], [0], [1], [0, 0, 1, 1], [], []>} : vector<8x4xf32>, vector<4x16xf32>, vector<8x16xf32> -> vector<8x16xf32>
    %43 = arith.addf %41, %42 : vector<8x16xf32>
    %44 = vector.broadcast %8 : vector<8x1xf32> to vector<8x16xf32>
    %45 = arith.addf %43, %44 : vector<8x16xf32>
    %c1_31 = arith.constant 1 : index
    %c0_32 = arith.constant 0 : index
    %c0_33 = arith.constant 0 : index
    %46 = vector.load %arg6[%c1_31, %c0_32, %c0_33] : memref<2x8x16xf32, #tpu.memory_space<vmem>>, vector<1x8x16xf32>
    %47 = vector.shape_cast %46 : vector<1x8x16xf32> to vector<8x16xf32>
    %48 = vector.shape_cast %45 : vector<8x16xf32> to vector<1x8x16xf32>
    tpu.vector_store %arg6[%c1_31, %c0_32, %c0_33], %48 {strides = array<i32>} : memref<2x8x16xf32, #tpu.memory_space<vmem>>, vector<1x8x16xf32>,
    return
  }
  func.func @transform_0(%arg0: i32, %arg1: i32) -> (i32, i32, i32) {
    %c0_i32 = arith.constant 0 : i32
    %c0_i32_0 = arith.constant 0 : i32
    return %arg0, %c0_i32, %arg1 : i32, i32, i32
  }
  func.func @transform_1(%arg0: i32, %arg1: i32) -> (i32, i32) {
    %c0_i32 = arith.constant 0 : i32
    %c0_i32_0 = arith.constant 0 : i32
    %c0_i32_1 = arith.constant 0 : i32
    return %c0_i32, %c0_i32_0 : i32, i32
  }
  func.func @transform_2(%arg0: i32, %arg1: i32) -> (i32, i32) {
    %c0_i32 = arith.constant 0 : i32
    %c0_i32_0 = arith.constant 0 : i32
    %c0_i32_1 = arith.constant 0 : i32
    return %c0_i32, %c0_i32_0 : i32, i32
  }
  func.func @transform_3(%arg0: i32, %arg1: i32) -> (i32, i32) {
    %c0_i32 = arith.constant 0 : i32
    %c0_i32_0 = arith.constant 0 : i32
    %c0_i32_1 = arith.constant 0 : i32
    return %c0_i32, %c0_i32_0 : i32, i32
  }
  func.func @transform_4(%arg0: i32, %arg1: i32) -> (i32, i32, i32) {
    %c0_i32 = arith.constant 0 : i32
    %c0_i32_0 = arith.constant 0 : i32
    return %arg0, %c0_i32, %arg1 : i32, i32, i32
  }
}

</mosaic_0001>

<llo_original>
// kernel: tpu_custom_call.1
$region0: #{tpu_custom_call.1}
  #allocation0 [shape = 'u32[]', space=smem, size = 0x4, offset = 0x4, fixed_abs, tag = 'smem constant byte address 0x4 - core index']
  #allocation1 [shape = 'u32[144,128]{1,0:T(1,128)}', space=vmem, size = 0x12000, scoped, tag = 'internal scratch']
  #allocation2 [shape = 'f32[2,4,1]{2,1,0:T(4,128)}', space=vmem, size = 0x1000, scoped, tag = 'scratch operand']
  %s0 = inlined_call_operand.vmem [shape: f32[2,4,16], index: 0, kind: input, shape index: {}]
  %s1 = inlined_call_operand.vmem [shape: f32[8,4], index: 1, kind: input, shape index: {}]
  %s2 = inlined_call_operand.vmem [shape: f32[8,4], index: 2, kind: input, shape index: {}]
  %s3 = inlined_call_operand.vmem [shape: f32[8,1], index: 3, kind: input, shape index: {}]
  %s4 = inlined_call_operand.hbm [shape: f32[2,8,16], index: 4, kind: output, shape index: {}]
  %s5 = sld [smem:[#allocation0]]
  $region30: #{tpu_custom_call.1} parent=0
    _
  %s7 = ssub.s32 1, %s5
  %s8 = scalar_select 0, %s7, %s5
  $region1: #{tpu_custom_call.1} parent=0
    #allocation3 [shape = 'u8[8192]{0}', space=vmem, size = 0x2000, scoped, tag = 'output window, operand 0, single buffered']
    #allocation4 [shape = 's32[1]{0}', space=sflag, size = 0x4, scoped, tag = 'scoped memory for tpu_custom_call.1']
    %9 = vsyncpa [#allocation4], 0
    // Predicated region
    $region2: #{tpu_custom_call.1} parent=1 // pred_check
      _
    $region3: #{tpu_custom_call.1} parent=1 // pred_check_branch
      %11 = sbr.rel (0) target = $region5
    $region4: #{tpu_custom_call.1} parent=1 // pred_region
      _
    $region5: #{tpu_custom_call.1} parent=1 // pred_fallthru
      _
    // Predicated region
    $region6: #{tpu_custom_call.1} parent=1 // pred_check
      _
    $region7: #{tpu_custom_call.1} parent=1 // pred_check_branch
      %13 = sbr.rel (0) target = $region9
    $region8: #{tpu_custom_call.1} parent=1 // pred_region
      _
    $region9: #{tpu_custom_call.1} parent=1 // pred_fallthru
      _
    // Predicated region
    $region10: #{tpu_custom_call.1} parent=1 // pred_check
      _
    $region11: #{tpu_custom_call.1} parent=1 // pred_check_branch
      %15 = sbr.rel (0) target = $region13
    $region12: #{tpu_custom_call.1} parent=1 // pred_region
      _
    $region13: #{tpu_custom_call.1} parent=1 // pred_fallthru
      _
    // Predicated region
    $region14: #{tpu_custom_call.1} parent=1 // pred_check
      _
    $region15: #{tpu_custom_call.1} parent=1 // pred_check_branch
      %17 = sbr.rel (0) target = $region17
    $region16: #{tpu_custom_call.1} parent=1 // pred_region
      _
    $region17: #{tpu_custom_call.1} parent=1 // pred_fallthru
      _
    %p18 = scmp.eq.s32.totalorder 0, 0
    // Predicated region
    $region18: #{tpu_custom_call.1} parent=1 // pred_check
      %p19 = pneg %p18
    $region19: #{tpu_custom_call.1} parent=1 // pred_check_branch
      %21 = sbr.rel (%p19) target = $region21
    $region20: #{tpu_custom_call.1} parent=1 // pred_region
      %vm22 = vcmask 3072
      %23 = vst.msk [vmem:[#allocation2] sm:$0xf] %vm22, 0.0
      %24 = vst.msk [vmem:[#allocation2 + $0x4] sm:$0xf] %vm22, 0.0
    $region21: #{tpu_custom_call.1} parent=1 // pred_fallthru
      _
    %v25 = vlaneseq
    %v26 = vand.u32 %v25, 127
    %vm27 = vcmp.eq.s32.totalorder %v26, 0
    %v28 = vld [vmem:[%s1] sm:$0xff]
    %v29 = vld [vmem:[%s2] sm:$0xff]
    %v30 = vld [vmem:[%s3] sm:$0xff]
    %v31 = vld [vmem:[%s0] sm:$0xf]
    %vm32 = vcmask 1047680
    %33 = vrot.lane.b32.xlu0 %v31, 16
    %v34 = vpop.permute.xlu0 %33
    %v35 = vsel %vm32, %v34, %v31
    %36 = vrot.lane.b32.xlu0 %v35, 16
    %v37 = vpop.permute.xlu0 %36
    %v38 = vsel %vm32, %v37, %v31
    %v39 = vld [vmem:[#allocation2] sm:$0xf]
    %41 = vset.pattern.permute.xlu0 0
    %42 = vperm.xlu0 %41, %v39
    %v43 = vpop.permute.xlu0 %42
    %46 = vrot.lane.b32.xlu0 %v38, 113
    %v47 = vpop.permute.xlu0 %46
    %v49 = vsel %vm27, %v43, %v47
    %51 = vrot.lane.b32.xlu0 %v31, 113
    %v52 = vpop.permute.xlu0 %51
    %vm54 = vcmask 3072
    %55 = vst.msk [vmem:[#allocation2] sm:$0xf] %vm54, %v52
    %vm56 = vcmask 31744
    %v58 = vsel %vm56, %v29, 0
    %vm60 = vcmask 1043456
    %v62 = vsel %vm60, %v49, 0
    %64 = vmatprep.subr.mxu0 0.0
    %65 = vmatpush1.msra.mxu0 %v62
    %66 = vmatprep.subr.mxu0 0.0
    %67 = vmatpush1.msra.mxu0 0.0
    %68 = vmatprep.subr.mxu0 0.0
    %69 = vmatpush1.msra.mxu0 0.0
    %70 = vmatprep.subr.mxu0 0.0
    %71 = vmatpush1.msra.mxu0 0.0
    %72 = vmatprep.subr.mxu0 0.0
    %73 = vmatpush1.msra.mxu0 0.0
    %74 = vmatprep.subr.mxu0 0.0
    %75 = vmatpush1.msra.mxu0 0.0
    %76 = vmatprep.subr.mxu0 0.0
    %77 = vmatpush1.msra.mxu0 0.0
    %78 = vmatprep.subr.mxu0 0.0
    %79 = vmatpush1.msra.mxu0 0.0
    %80 = vmatprep.subr.mxu0 0.0
    %81 = vmatpush1.msra.mxu0 0.0
    %82 = vmatprep.subr.mxu0 0.0
    %83 = vmatpush1.msra.mxu0 0.0
    %84 = vmatprep.subr.mxu0 0.0
    %85 = vmatpush1.msra.mxu0 0.0
    %86 = vmatprep.subr.mxu0 0.0
    %87 = vmatpush1.msra.mxu0 0.0
    %88 = vmatprep.subr.mxu0 0.0
    %89 = vmatpush1.msra.mxu0 0.0
    %90 = vmatprep.subr.mxu0 0.0
    %91 = vmatpush1.msra.mxu0 0.0
    %92 = vmatprep.subr.mxu0 0.0
    %93 = vmatpush1.msra.mxu0 0.0
    %94 = vmatprep.subr.mxu0 0.0
    %95 = vmatpush1.msra.mxu0 0.0
    %96 = vmatprep.subr.mxu0 0.0
    %97 = vmatpush1.msra.mxu0 0.0
    %98 = vmatprep.subr.mxu0 0.0
    %99 = vmatpush1.msra.mxu0 0.0
    %100 = vmatprep.subr.mxu0 0.0
    %101 = vmatpush1.msra.mxu0 0.0
    %102 = vmatprep.subr.mxu0 0.0
    %103 = vmatpush1.msra.mxu0 0.0
    %104 = vmatprep.subr.mxu0 0.0
    %105 = vmatpush1.msra.mxu0 0.0
    %106 = vmatprep.subr.mxu0 0.0
    %107 = vmatpush1.msra.mxu0 0.0
    %108 = vmatprep.subr.mxu0 0.0
    %109 = vmatpush1.msra.mxu0 0.0
    %110 = vmatprep.subr.mxu0 0.0
    %111 = vmatpush1.msra.mxu0 0.0
    %112 = vmatprep.subr.mxu0 0.0
    %113 = vmatpush1.msra.mxu0 0.0
    %114 = vmatprep.subr.mxu0 0.0
    %115 = vmatpush1.msra.mxu0 0.0
    %116 = vmatprep.subr.mxu0 0.0
    %117 = vmatpush1.msra.mxu0 0.0
    %118 = vmatprep.subr.mxu0 0.0
    %119 = vmatpush1.msra.mxu0 0.0
    %120 = vmatprep.subr.mxu0 0.0
    %121 = vmatpush1.msra.mxu0 0.0
    %122 = vmatprep.subr.mxu0 0.0
    %123 = vmatpush1.msra.mxu0 0.0
    %124 = vmatprep.subr.mxu0 0.0
    %125 = vmatpush1.msra.mxu0 0.0
    %126 = vmatprep.subr.mxu0 0.0
    %127 = vmatpush1.msra.mxu0 0.0
    %128 = vmatprep.mubr.f32.mxu0 0.0
    %129 = vmatmul.mubr.f32.gmra.mrb[0].mxu0 %v58
    %v130 = vpop.f32.mrb[0].mxu0
    %v131 = vadd.f32 0.0, %v130
    %v132 = vpop.f32.mrb[0].mxu0
    %133 = vdwg.mxu0
    %v135 = vsel %vm56, %v28, 0
    %v137 = vsel %vm60, %v31, 0
    %139 = vmatprep.subr.mxu0 0.0
    %140 = vmatpush1.msra.mxu0 %v137
    %141 = vmatprep.subr.mxu0 0.0
    %142 = vmatpush1.msra.mxu0 0.0
    %143 = vmatprep.subr.mxu0 0.0
    %144 = vmatpush1.msra.mxu0 0.0
    %145 = vmatprep.subr.mxu0 0.0
    %146 = vmatpush1.msra.mxu0 0.0
    %147 = vmatprep.subr.mxu0 0.0
    %148 = vmatpush1.msra.mxu0 0.0
    %149 = vmatprep.subr.mxu0 0.0
    %150 = vmatpush1.msra.mxu0 0.0
    %151 = vmatprep.subr.mxu0 0.0
    %152 = vmatpush1.msra.mxu0 0.0
    %153 = vmatprep.subr.mxu0 0.0
    %154 = vmatpush1.msra.mxu0 0.0
    %155 = vmatprep.subr.mxu0 0.0
    %156 = vmatpush1.msra.mxu0 0.0
    %157 = vmatprep.subr.mxu0 0.0
    %158 = vmatpush1.msra.mxu0 0.0
    %159 = vmatprep.subr.mxu0 0.0
    %160 = vmatpush1.msra.mxu0 0.0
    %161 = vmatprep.subr.mxu0 0.0
    %162 = vmatpush1.msra.mxu0 0.0
    %163 = vmatprep.subr.mxu0 0.0
    %164 = vmatpush1.msra.mxu0 0.0
    %165 = vmatprep.subr.mxu0 0.0
    %166 = vmatpush1.msra.mxu0 0.0
    %167 = vmatprep.subr.mxu0 0.0
    %168 = vmatpush1.msra.mxu0 0.0
    %169 = vmatprep.subr.mxu0 0.0
    %170 = vmatpush1.msra.mxu0 0.0
    %171 = vmatprep.subr.mxu0 0.0
    %172 = vmatpush1.msra.mxu0 0.0
    %173 = vmatprep.subr.mxu0 0.0
    %174 = vmatpush1.msra.mxu0 0.0
    %175 = vmatprep.subr.mxu0 0.0
    %176 = vmatpush1.msra.mxu0 0.0
    %177 = vmatprep.subr.mxu0 0.0
    %178 = vmatpush1.msra.mxu0 0.0
    %179 = vmatprep.subr.mxu0 0.0
    %180 = vmatpush1.msra.mxu0 0.0
    %181 = vmatprep.subr.mxu0 0.0
    %182 = vmatpush1.msra.mxu0 0.0
    %183 = vmatprep.subr.mxu0 0.0
    %184 = vmatpush1.msra.mxu0 0.0
    %185 = vmatprep.subr.mxu0 0.0
    %186 = vmatpush1.msra.mxu0 0.0
    %187 = vmatprep.subr.mxu0 0.0
    %188 = vmatpush1.msra.mxu0 0.0
    %189 = vmatprep.subr.mxu0 0.0
    %190 = vmatpush1.msra.mxu0 0.0
    %191 = vmatprep.subr.mxu0 0.0
    %192 = vmatpush1.msra.mxu0 0.0
    %193 = vmatprep.subr.mxu0 0.0
    %194 = vmatpush1.msra.mxu0 0.0
    %195 = vmatprep.subr.mxu0 0.0
    %196 = vmatpush1.msra.mxu0 0.0
    %197 = vmatprep.subr.mxu0 0.0
    %198 = vmatpush1.msra.mxu0 0.0
    %199 = vmatprep.subr.mxu0 0.0
    %200 = vmatpush1.msra.mxu0 0.0
    %201 = vmatprep.subr.mxu0 0.0
    %202 = vmatpush1.msra.mxu0 0.0
    %203 = vmatprep.mubr.f32.mxu0 0.0
    %204 = vmatmul.mubr.f32.gmra.mrb[0].mxu0 %v135
    %v205 = vpop.f32.mrb[0].mxu0
    %v206 = vadd.f32 %v131, %v205
    %v207 = vpop.f32.mrb[0].mxu0
    %208 = vdwg.mxu0
    %210 = vset.pattern.permute.xlu0 0
    %211 = vperm.xlu0 %210, %v30
    %v212 = vpop.permute.xlu0 %211
    %v214 = vadd.f32 %v206, %v212
    %vm215 = vcmask 130048
    %216 = vst.msk [vmem:[#allocation3] sm:$0xff] %vm215, %v214
    %s217 = scalar_lea.vmem %s0, 4
    %v218 = vld [vmem:[%s217] sm:$0xf]
    %219 = vrot.lane.b32.xlu0 %v218, 16
    %v220 = vpop.permute.xlu0 %219
    %v221 = vsel %vm32, %v220, %v218
    %222 = vrot.lane.b32.xlu0 %v221, 16
    %v223 = vpop.permute.xlu0 %222
    %v224 = vsel %vm32, %v223, %v218
    %s225 = scalar_lea.vmem [#allocation2], 4
    %v226 = vld [vmem:[%s225] sm:$0xf]
    %228 = vset.pattern.permute.xlu0 0
    %229 = vperm.xlu0 %228, %v226
    %v230 = vpop.permute.xlu0 %229
    %233 = vrot.lane.b32.xlu0 %v224, 113
    %v234 = vpop.permute.xlu0 %233
    %v236 = vsel %vm27, %v230, %v234
    %238 = vrot.lane.b32.xlu0 %v218, 113
    %v239 = vpop.permute.xlu0 %238
    %241 = vst.msk [vmem:[%s225] sm:$0xf] %vm54, %v239
    %v243 = vsel %vm60, %v236, 0
    %245 = vmatprep.subr.mxu0 0.0
    %246 = vmatpush1.msra.mxu0 %v243
    %247 = vmatprep.subr.mxu0 0.0
    %248 = vmatpush1.msra.mxu0 0.0
    %249 = vmatprep.subr.mxu0 0.0
    %250 = vmatpush1.msra.mxu0 0.0
    %251 = vmatprep.subr.mxu0 0.0
    %252 = vmatpush1.msra.mxu0 0.0
    %253 = vmatprep.subr.mxu0 0.0
    %254 = vmatpush1.msra.mxu0 0.0
    %255 = vmatprep.subr.mxu0 0.0
    %256 = vmatpush1.msra.mxu0 0.0
    %257 = vmatprep.subr.mxu0 0.0
    %258 = vmatpush1.msra.mxu0 0.0
    %259 = vmatprep.subr.mxu0 0.0
    %260 = vmatpush1.msra.mxu0 0.0
    %261 = vmatprep.subr.mxu0 0.0
    %262 = vmatpush1.msra.mxu0 0.0
    %263 = vmatprep.subr.mxu0 0.0
    %264 = vmatpush1.msra.mxu0 0.0
    %265 = vmatprep.subr.mxu0 0.0
    %266 = vmatpush1.msra.mxu0 0.0
    %267 = vmatprep.subr.mxu0 0.0
    %268 = vmatpush1.msra.mxu0 0.0
    %269 = vmatprep.subr.mxu0 0.0
    %270 = vmatpush1.msra.mxu0 0.0
    %271 = vmatprep.subr.mxu0 0.0
    %272 = vmatpush1.msra.mxu0 0.0
    %273 = vmatprep.subr.mxu0 0.0
    %274 = vmatpush1.msra.mxu0 0.0
    %275 = vmatprep.subr.mxu0 0.0
    %276 = vmatpush1.msra.mxu0 0.0
    %277 = vmatprep.subr.mxu0 0.0
    %278 = vmatpush1.msra.mxu0 0.0
    %279 = vmatprep.subr.mxu0 0.0
    %280 = vmatpush1.msra.mxu0 0.0
    %281 = vmatprep.subr.mxu0 0.0
    %282 = vmatpush1.msra.mxu0 0.0
    %283 = vmatprep.subr.mxu0 0.0
    %284 = vmatpush1.msra.mxu0 0.0
    %285 = vmatprep.subr.mxu0 0.0
    %286 = vmatpush1.msra.mxu0 0.0
    %287 = vmatprep.subr.mxu0 0.0
    %288 = vmatpush1.msra.mxu0 0.0
    %289 = vmatprep.subr.mxu0 0.0
    %290 = vmatpush1.msra.mxu0 0.0
    %291 = vmatprep.subr.mxu0 0.0
    %292 = vmatpush1.msra.mxu0 0.0
    %293 = vmatprep.subr.mxu0 0.0
    %294 = vmatpush1.msra.mxu0 0.0
    %295 = vmatprep.subr.mxu0 0.0
    %296 = vmatpush1.msra.mxu0 0.0
    %297 = vmatprep.subr.mxu0 0.0
    %298 = vmatpush1.msra.mxu0 0.0
    %299 = vmatprep.subr.mxu0 0.0
    %300 = vmatpush1.msra.mxu0 0.0
    %301 = vmatprep.subr.mxu0 0.0
    %302 = vmatpush1.msra.mxu0 0.0
    %303 = vmatprep.subr.mxu0 0.0
    %304 = vmatpush1.msra.mxu0 0.0
    %305 = vmatprep.subr.mxu0 0.0
    %306 = vmatpush1.msra.mxu0 0.0
    %307 = vmatprep.subr.mxu0 0.0
    %308 = vmatpush1.msra.mxu0 0.0
    %309 = vmatprep.mubr.f32.mxu0 0.0
    %310 = vmatmul.mubr.f32.gmra.mrb[0].mxu0 %v58
    %v311 = vpop.f32.mrb[0].mxu0
    %v312 = vadd.f32 0.0, %v311
    %v313 = vpop.f32.mrb[0].mxu0
    %314 = vdwg.mxu0
    %v315 = vsel %vm60, %v218, 0
    %317 = vmatprep.subr.mxu0 0.0
    %318 = vmatpush1.msra.mxu0 %v315
    %319 = vmatprep.subr.mxu0 0.0
    %320 = vmatpush1.msra.mxu0 0.0
    %321 = vmatprep.subr.mxu0 0.0
    %322 = vmatpush1.msra.mxu0 0.0
    %323 = vmatprep.subr.mxu0 0.0
    %324 = vmatpush1.msra.mxu0 0.0
    %325 = vmatprep.subr.mxu0 0.0
    %326 = vmatpush1.msra.mxu0 0.0
    %327 = vmatprep.subr.mxu0 0.0
    %328 = vmatpush1.msra.mxu0 0.0
    %329 = vmatprep.subr.mxu0 0.0
    %330 = vmatpush1.msra.mxu0 0.0
    %331 = vmatprep.subr.mxu0 0.0
    %332 = vmatpush1.msra.mxu0 0.0
    %333 = vmatprep.subr.mxu0 0.0
    %334 = vmatpush1.msra.mxu0 0.0
    %335 = vmatprep.subr.mxu0 0.0
    %336 = vmatpush1.msra.mxu0 0.0
    %337 = vmatprep.subr.mxu0 0.0
    %338 = vmatpush1.msra.mxu0 0.0
    %339 = vmatprep.subr.mxu0 0.0
    %340 = vmatpush1.msra.mxu0 0.0
    %341 = vmatprep.subr.mxu0 0.0
    %342 = vmatpush1.msra.mxu0 0.0
    %343 = vmatprep.subr.mxu0 0.0
    %344 = vmatpush1.msra.mxu0 0.0
    %345 = vmatprep.subr.mxu0 0.0
    %346 = vmatpush1.msra.mxu0 0.0
    %347 = vmatprep.subr.mxu0 0.0
    %348 = vmatpush1.msra.mxu0 0.0
    %349 = vmatprep.subr.mxu0 0.0
    %350 = vmatpush1.msra.mxu0 0.0
    %351 = vmatprep.subr.mxu0 0.0
    %352 = vmatpush1.msra.mxu0 0.0
    %353 = vmatprep.subr.mxu0 0.0
    %354 = vmatpush1.msra.mxu0 0.0
    %355 = vmatprep.subr.mxu0 0.0
    %356 = vmatpush1.msra.mxu0 0.0
    %357 = vmatprep.subr.mxu0 0.0
    %358 = vmatpush1.msra.mxu0 0.0
    %359 = vmatprep.subr.mxu0 0.0
    %360 = vmatpush1.msra.mxu0 0.0
    %361 = vmatprep.subr.mxu0 0.0
    %362 = vmatpush1.msra.mxu0 0.0
    %363 = vmatprep.subr.mxu0 0.0
    %364 = vmatpush1.msra.mxu0 0.0
    %365 = vmatprep.subr.mxu0 0.0
    %366 = vmatpush1.msra.mxu0 0.0
    %367 = vmatprep.subr.mxu0 0.0
    %368 = vmatpush1.msra.mxu0 0.0
    %369 = vmatprep.subr.mxu0 0.0
    %370 = vmatpush1.msra.mxu0 0.0
    %371 = vmatprep.subr.mxu0 0.0
    %372 = vmatpush1.msra.mxu0 0.0
    %373 = vmatprep.subr.mxu0 0.0
    %374 = vmatpush1.msra.mxu0 0.0
    %375 = vmatprep.subr.mxu0 0.0
    %376 = vmatpush1.msra.mxu0 0.0
    %377 = vmatprep.subr.mxu0 0.0
    %378 = vmatpush1.msra.mxu0 0.0
    %379 = vmatprep.subr.mxu0 0.0
    %380 = vmatpush1.msra.mxu0 0.0
    %381 = vmatprep.mubr.f32.mxu0 0.0
    %382 = vmatmul.mubr.f32.gmra.mrb[0].mxu0 %v135
    %v383 = vpop.f32.mrb[0].mxu0
    %v384 = vadd.f32 %v312, %v383
    %v385 = vpop.f32.mrb[0].mxu0
    %386 = vdwg.mxu0
    %v387 = vadd.f32 %v384, %v212
    %s388 = scalar_lea.vmem [#allocation3], 8
    %389 = vst.msk [vmem:[%s388] sm:$0xff] %vm215, %v387
    // Predicated region
    $region22: #{tpu_custom_call.1} parent=1 // pred_check
      _
    $region23: #{tpu_custom_call.1} parent=1 // pred_check_branch
      %391 = sbr.rel (0) target = $region25
    $region24: #{tpu_custom_call.1} parent=1 // pred_region
      %s393 = ssub.s32 256, 256
      %394 = vsyncadd [#allocation4], %s393
      %s395 = sshll.u32 [#allocation3], 4
      %s396 = int_to_ptr.vmem [resolvable:$true] %s395
      %401 = dma.vmem_to_hbm [thread:$0]  %s396, 256, %s4, [#allocation4], 128, 128, 8
    $region25: #{tpu_custom_call.1} parent=1 // pred_fallthru
      _
    // Predicated region
    $region26: #{tpu_custom_call.1} parent=1 // pred_check
      _
    $region27: #{tpu_custom_call.1} parent=1 // pred_check_branch
      %403 = sbr.rel (0) target = $region29
    $region28: #{tpu_custom_call.1} parent=1 // pred_region
      %404 = dma.done [#allocation4], 256
    $region29: #{tpu_custom_call.1} parent=1 // pred_fallthru
      _
    %405 = vsyncpa [#allocation4], 1

</llo_original>
